<compile_context>
chip_gen: v5e
topology: v5e:2x2
jax: 0.10.0
libtpu: 0.0.40
codegen_flags: <defaults>
</compile_context>

<pallas_src>
import functools

import jax
import jax.numpy as jnp
from jax import lax
from jax.experimental import pallas as pl
from jax.experimental.pallas import tpu as pltpu


def _pick_tile_hw(hw: int) -> int:
    # Largest lane-aligned spatial tile <= 512: big tiles amortize the
    # ~0.35us/step pipeline overhead; a 512x512 f32 activation slab is 1 MiB,
    # comfortably double-buffered in VMEM.
    if hw % 128 == 0:
        return min(512, hw)
    if hw <= 512:
        return hw            # full extent: exempt from lane divisibility
    return 512               # ragged last block; Pallas masks the boundary


# ----------------------------------------------------------------------------
# Pallas kernel: fused 1x1 conv (matmul over channels) + bias
# ----------------------------------------------------------------------------
def _bbox_head_kernel(x_ref, w_ref, b_ref, o_ref):
    # x_ref: (1, Cin, T)   activation slab, NCHW layout (channels on sublanes)
    # w_ref: (Cin, Cout)   1x1-conv weight in matmul layout (resident)
    # b_ref: (1, Cout)     bias row (resident)
    # o_ref: (1, T, Cout)  NHWC-ordered output tile
    y = lax.dot_general(
        x_ref[0], w_ref[...],
        dimension_numbers=(((0,), (0,)), ((), ())),    # contract channel axis
        preferred_element_type=jnp.float32)            # (T, Cout) via MXU
    o_ref[0] = (y + b_ref[...]).astype(o_ref.dtype)


def bbox_head_conv(x_nchw, w, b):
    """x_nchw: (N, Cin, H, W); w: (Cin, Cout); b: (1, Cout) -> (N, H*W, Cout)."""
    N, Cin, H, W = x_nchw.shape
    Cout = w.shape[1]
    HW = H * W
    tile = _pick_tile_hw(HW)
    x3 = x_nchw.reshape(N, Cin, HW)                    # free (contiguous) reshape

    return pl.pallas_call(
        _bbox_head_kernel,
        out_shape=jax.ShapeDtypeStruct((N, HW, Cout), x_nchw.dtype),
        grid=(N, pl.cdiv(HW, tile)),
        in_specs=[
            pl.BlockSpec((1, Cin, tile), lambda n, j: (n, 0, j)),  # streamed
            pl.BlockSpec((Cin, Cout), lambda n, j: (0, 0)),        # resident
            pl.BlockSpec((1, Cout), lambda n, j: (0, 0)),          # resident
        ],
        out_specs=pl.BlockSpec((1, tile, Cout), lambda n, j: (n, j, 0)),
        compiler_params=pltpu.CompilerParams(
            dimension_semantics=("parallel", "parallel")),
    )(x3, w, b)


# ----------------------------------------------------------------------------
# Parameter preparation (done once, outside the per-call forward)
# ----------------------------------------------------------------------------
def prepare_params(conv_w, conv_b):
    # conv_w: PyTorch layout (Cout, Cin, 1, 1); conv_b: (Cout,)
    Cout, Cin = conv_w.shape[0], conv_w.shape[1]
    w = jnp.transpose(conv_w.reshape(Cout, Cin), (1, 0))   # (Cin, Cout)
    b = conv_b.reshape(1, Cout)
    return {"w": w, "b": b}


# ----------------------------------------------------------------------------
# Forward pass (equivalent to BboxHead.forward)
# ----------------------------------------------------------------------------
def bbox_head_forward(params, x_nchw):
    w, b = params["w"], params["b"]
    Cout = w.shape[1]
    N, _, H, W = x_nchw.shape
    y = bbox_head_conv(x_nchw, w, b)                   # (N, H*W, Cout), NHWC order
    # permute(0,2,3,1) + view(N, -1, 4): already NHWC-ordered -> pure reshape.
    return y.reshape(N, H * W * (Cout // 4), 4)


if __name__ == "__main__":
    key = jax.random.PRNGKey(0)
    kx, kw, kb = jax.random.split(key, 3)

    # Shapes consistent with the module defaults (inchannels=512, A=3).
    N, Cin, H, W = 2, 512, 16, 16
    num_anchors = 3
    Cout = 4 * num_anchors

    x = jax.random.normal(kx, (N, Cin, H, W), jnp.float32)
    conv_w = 0.05 * jax.random.normal(kw, (Cout, Cin, 1, 1), jnp.float32)
    conv_b = 0.05 * jax.random.normal(kb, (Cout,), jnp.float32)

    params = prepare_params(conv_w, conv_b)
    fwd = jax.jit(functools.partial(bbox_head_forward, params))

    out = jax.block_until_ready(fwd(x))
    assert out.shape == (N, H * W * num_anchors, 4), out.shape
    assert bool(jnp.all(jnp.isfinite(out)))

    # Pure-JAX reference with identical semantics to the PyTorch module.
    ref = jnp.einsum("nchw,oc->nhwo", x, conv_w.reshape(Cout, Cin),
                     precision=lax.Precision.HIGHEST) + conv_b
    ref = ref.reshape(N, H * W * num_anchors, 4)
    assert jnp.allclose(out, ref, atol=2e-2, rtol=2e-2), \
        float(jnp.max(jnp.abs(out - ref)))

    print("KERNEL_OK")
</pallas_src>

<mosaic_0001>
module attributes {stable_mosaic.version = 11 : i64} {
  func.func @_bbox_head_kernel(%arg0: i32, %arg1: i32, %arg2: memref<1x512x256xf32, #tpu.memory_space<vmem>>, %arg3: memref<512x12xf32, #tpu.memory_space<vmem>>, %arg4: memref<1x12xf32, #tpu.memory_space<vmem>>, %arg5: memref<1x256x12xf32, #tpu.memory_space<vmem>>) attributes {dimension_semantics = [#tpu.dimension_semantics<parallel>, #tpu.dimension_semantics<parallel>], iteration_bounds = array<i64: 2, 1>, scalar_prefetch = 0 : i64, scratch_operands = 0 : i64, tpu.core_type = #tpu.core_type<tc>, window_params = [{transform_indices = @transform_0, window_bounds = array<i64: 1, 512, 256>}, {pipeline_mode = #tpu.pipeline_mode<synchronous>, transform_indices = @transform_1, window_bounds = array<i64: 512, 12>}, {pipeline_mode = #tpu.pipeline_mode<synchronous>, transform_indices = @transform_2, window_bounds = array<i64: 1, 12>}, {transform_indices = @transform_3, window_bounds = array<i64: 1, 256, 12>}]} {
    %c0 = arith.constant 0 : index
    %c0_0 = arith.constant 0 : index
    %c0_1 = arith.constant 0 : index
    %0 = vector.load %arg2[%c0, %c0_0, %c0_1] : memref<1x512x256xf32, #tpu.memory_space<vmem>>, vector<1x512x256xf32>
    %1 = vector.shape_cast %0 : vector<1x512x256xf32> to vector<512x256xf32>
    %c0_2 = arith.constant 0 : index
    %c0_3 = arith.constant 0 : index
    %2 = vector.load %arg3[%c0_2, %c0_3] : memref<512x12xf32, #tpu.memory_space<vmem>>, vector<512x12xf32>
    %cst = arith.constant dense<0.000000e+00> : vector<256x12xf32>
    %3 = tpu.matmul %1, %2, %cst {dimension_numbers = #tpu.dot_dimension_numbers<[0], [0], [1], [1], [0, 1, 1, 1], [], []>} : vector<512x256xf32>, vector<512x12xf32>, vector<256x12xf32> -> vector<256x12xf32>
    %c0_4 = arith.constant 0 : index
    %c0_5 = arith.constant 0 : index
    %4 = vector.load %arg4[%c0_4, %c0_5] : memref<1x12xf32, #tpu.memory_space<vmem>>, vector<1x12xf32>
    %5 = vector.broadcast %4 : vector<1x12xf32> to vector<256x12xf32>
    %6 = arith.addf %3, %5 : vector<256x12xf32>
    %c0_6 = arith.constant 0 : index
    %c0_7 = arith.constant 0 : index
    %c0_8 = arith.constant 0 : index
    %7 = vector.load %arg5[%c0_6, %c0_7, %c0_8] : memref<1x256x12xf32, #tpu.memory_space<vmem>>, vector<1x256x12xf32>
    %8 = vector.shape_cast %7 : vector<1x256x12xf32> to vector<256x12xf32>
    %9 = vector.shape_cast %6 : vector<256x12xf32> to vector<1x256x12xf32>
    tpu.vector_store %arg5[%c0_6, %c0_7, %c0_8], %9 {strides = array<i32>} : memref<1x256x12xf32, #tpu.memory_space<vmem>>, vector<1x256x12xf32>,
    return
  }
  func.func @transform_0(%arg0: i32, %arg1: i32) -> (i32, i32, i32) {
    %c0_i32 = arith.constant 0 : i32
    %c0_i32_0 = arith.constant 0 : i32
    return %arg0, %c0_i32, %arg1 : i32, i32, i32
  }
  func.func @transform_1(%arg0: i32, %arg1: i32) -> (i32, i32) {
    %c0_i32 = arith.constant 0 : i32
    %c0_i32_0 = arith.constant 0 : i32
    %c0_i32_1 = arith.constant 0 : i32
    return %c0_i32, %c0_i32_0 : i32, i32
  }
  func.func @transform_2(%arg0: i32, %arg1: i32) -> (i32, i32) {
    %c0_i32 = arith.constant 0 : i32
    %c0_i32_0 = arith.constant 0 : i32
    %c0_i32_1 = arith.constant 0 : i32
    return %c0_i32, %c0_i32_0 : i32, i32
  }
  func.func @transform_3(%arg0: i32, %arg1: i32) -> (i32, i32, i32) {
    %c0_i32 = arith.constant 0 : i32
    %c0_i32_0 = arith.constant 0 : i32
    return %arg0, %arg1, %c0_i32 : i32, i32, i32
  }
}

</mosaic_0001>

<llo_original>
// kernel: bbox_head_forward.1
$region0: #{bbox_head_forward.1}
  #allocation0 [shape = 'u32[]', space=smem, size = 0x4, offset = 0x4, fixed_abs, tag = 'smem constant byte address 0x4 - core index']
  #allocation1 [shape = 'u32[72,128]{1,0:T(1,128)}', space=vmem, size = 0x9000, scoped, tag = 'internal scratch']
  %s0 = inlined_call_operand.vmem [shape: f32[2,512,256], index: 0, kind: input, shape index: {}]
  %s1 = inlined_call_operand.vmem [shape: f32[512,12], index: 1, kind: input, shape index: {}]
  %s2 = inlined_call_operand.vmem [shape: f32[1,12], index: 2, kind: input, shape index: {}]
  %s3 = inlined_call_operand.vmem [shape: f32[2,256,12], index: 3, kind: output, shape index: {}]
  %s4 = sld [smem:[#allocation0]]
  $region45: #{bbox_head_forward.1} parent=0
    _
  %s6 = ssub.s32 1, %s4
  %s7 = scalar_select 0, %s6, %s4
  loop: start=0, step=1, limit=4
  $region2: #{bbox_head_forward.1} parent=0 // loop_pre_header
    _
  $region3: #{bbox_head_forward.1} parent=0 // loop_header
    %s9 = sphi 0, %s13
    %p10 = scmp.ge.s32.totalorder %s9, 4
    %s16 = sphi 0, %s28
    %s17 = sphi 0, %s24
    %s18 = sphi 0, %s16
    %s19 = sphi 0, %s17
    %s20 = sphi 0, %s18
    %s21 = sphi 0, %s19
    %s33 = sphi 0, %s35
    %s36 = sphi 0, %s33
    %s37 = sphi 0, %s36
    %s53 = sphi 0, %s37
    %s57 = sphi 0, %s57
    %s59 = sphi 0, %s57
    %s60 = sphi 0, %s59
    %s74 = sphi 0, %s60
    %s78 = sphi 0, %s78
    %s80 = sphi 0, %s78
    %s81 = sphi 0, %s80
    %s95 = sphi 0, %s81
    %s103 = sphi 0, %s105
    %s106 = sphi 0, %s103
    %s107 = sphi 0, %s106
    %s123 = sphi 0, %s107
  $region4: #{bbox_head_forward.1} parent=0 // loop_header_branch
    %12 = sbr.rel (%p10) target = $region8
  $region5: #{bbox_head_forward.1} parent=0 // loop_body
    %s14 = ssub.s32 %s9, 1
    %s15 = ssub.s32 %s9, 2
    %s22 = sadd.s32 1, %s17
    %p23 = scmp.ge.s32.totalorder %s22, 1
    %s24 = scalar_select %p23, 0, %s22
    %s25 = sadd.s32 1, %s16
    %s26 = scalar_select %p23, %s25, %s16
    %p27 = scmp.ge.s32.totalorder %s26, 2
    %s28 = scalar_select %p27, 0, %s26
    %s29 = ssub.s32 %s16, %s28
    %s30 = ssub.s32 %s17, %s24
    %s31 = sor.u32 %s29, %s30
    %p32 = scmp.eq.s32.totalorder %s31, 0
    %s34 = sadd.s32 %s33, 1
    %s35 = scalar_select %p32, %s33, %s34
    %p38 = pneg %p32
    %p39 = scmp.eq.s32.totalorder %s9, 1
    %p40 = por %p38, %p39
    %p41 = scmp.ne.s32.totalorder %s33, %s36
    %p42 = scmp.eq.s32.totalorder %s9, 0
    %p43 = por %p41, %p42
    %p44 = scmp.ne.s32.totalorder %s33, %s36
    %p45 = scmp.eq.s32.totalorder %s14, 1
    %p46 = por %p44, %p45
    %p47 = scmp.ne.s32.totalorder %s36, %s37
    %p48 = scmp.eq.s32.totalorder %s14, 0
    %p49 = por %p47, %p48
    %p50 = scmp.ne.s32.totalorder %s36, %s37
    %p51 = scmp.eq.s32.totalorder %s15, 1
    %p52 = por %p50, %p51
    %p54 = scmp.ne.s32.totalorder %s37, %s53
    %p55 = scmp.eq.s32.totalorder %s15, 0
    %p56 = por %p54, %p55
    %s58 = sadd.s32 %s57, 1
    %p61 = scmp.eq.s32.totalorder %s9, 1
    %p62 = scmp.ne.s32.totalorder %s57, %s59
    %p63 = scmp.eq.s32.totalorder %s9, 0
    %p64 = por %p62, %p63
    %p65 = scmp.ne.s32.totalorder %s57, %s59
    %p66 = scmp.eq.s32.totalorder %s14, 1
    %p67 = por %p65, %p66
    %p68 = scmp.ne.s32.totalorder %s59, %s60
    %p69 = scmp.eq.s32.totalorder %s14, 0
    %p70 = por %p68, %p69
    %p71 = scmp.ne.s32.totalorder %s59, %s60
    %p72 = scmp.eq.s32.totalorder %s15, 1
    %p73 = por %p71, %p72
    %p75 = scmp.ne.s32.totalorder %s60, %s74
    %p76 = scmp.eq.s32.totalorder %s15, 0
    %p77 = por %p75, %p76
    %s79 = sadd.s32 %s78, 1
    %p82 = scmp.eq.s32.totalorder %s9, 1
    %p83 = scmp.ne.s32.totalorder %s78, %s80
    %p84 = scmp.eq.s32.totalorder %s9, 0
    %p85 = por %p83, %p84
    %p86 = scmp.ne.s32.totalorder %s78, %s80
    %p87 = scmp.eq.s32.totalorder %s14, 1
    %p88 = por %p86, %p87
    %p89 = scmp.ne.s32.totalorder %s80, %s81
    %p90 = scmp.eq.s32.totalorder %s14, 0
    %p91 = por %p89, %p90
    %p92 = scmp.ne.s32.totalorder %s80, %s81
    %p93 = scmp.eq.s32.totalorder %s15, 1
    %p94 = por %p92, %p93
    %p96 = scmp.ne.s32.totalorder %s81, %s95
    %p97 = scmp.eq.s32.totalorder %s15, 0
    %p98 = por %p96, %p97
    %s99 = ssub.s32 %s16, %s28
    %s100 = ssub.s32 %s17, %s24
    %s101 = sor.u32 %s99, %s100
    %p102 = scmp.eq.s32.totalorder %s101, 0
    %s104 = sadd.s32 %s103, 1
    %s105 = scalar_select %p102, %s103, %s104
    %p108 = pneg %p102
    %p109 = scmp.eq.s32.totalorder %s9, 1
    %p110 = por %p108, %p109
    %p111 = scmp.ne.s32.totalorder %s103, %s106
    %p112 = scmp.eq.s32.totalorder %s9, 0
    %p113 = por %p111, %p112
    %p114 = scmp.ne.s32.totalorder %s103, %s106
    %p115 = scmp.eq.s32.totalorder %s14, 1
    %p116 = por %p114, %p115
    %p117 = scmp.ne.s32.totalorder %s106, %s107
    %p118 = scmp.eq.s32.totalorder %s14, 0
    %p119 = por %p117, %p118
    %p120 = scmp.ne.s32.totalorder %s106, %s107
    %p121 = scmp.eq.s32.totalorder %s15, 1
    %p122 = por %p120, %p121
    %p124 = scmp.ne.s32.totalorder %s107, %s123
    %p125 = scmp.eq.s32.totalorder %s15, 0
    %p126 = por %p124, %p125
    %p127 = scmp.le.s32.totalorder 1, %s9
    %p128 = scmp.lt.s32.totalorder %s9, 3
    %p129 = pnand %p127, %p128
    %p130 = pneg %p129
    // Predicated region
    $region9: #{bbox_head_forward.1} parent=5 // pred_check
      _
    $region10: #{bbox_head_forward.1} parent=5 // pred_check_branch
      %132 = sbr.rel (%p129) target = $region12
    $region11: #{bbox_head_forward.1} parent=5 // pred_region
      %s133 = ssub.s32 %s9, 1
      // Predicated region
      $region13: #{bbox_head_forward.1} parent=11 // pred_check
        %p134 = pneg %p70
      $region14: #{bbox_head_forward.1} parent=11 // pred_check_branch
        %136 = sbr.rel (%p134) target = $region16
      $region15: #{bbox_head_forward.1} parent=11 // pred_region
        _
      $region16: #{bbox_head_forward.1} parent=11 // pred_fallthru
        _
      // Predicated region
      $region17: #{bbox_head_forward.1} parent=11 // pred_check
        %p137 = pneg %p91
      $region18: #{bbox_head_forward.1} parent=11 // pred_check_branch
        %139 = sbr.rel (%p137) target = $region20
      $region19: #{bbox_head_forward.1} parent=11 // pred_region
        _
      $region20: #{bbox_head_forward.1} parent=11 // pred_fallthru
        _
    $region12: #{bbox_head_forward.1} parent=5 // pred_fallthru
      _
    %p140 = scmp.lt.s32.totalorder %s9, 2
    // Predicated region
    $region21: #{bbox_head_forward.1} parent=5 // pred_check
      %p141 = pneg %p140
    $region22: #{bbox_head_forward.1} parent=5 // pred_check_branch
      %143 = sbr.rel (%p141) target = $region24
    $region23: #{bbox_head_forward.1} parent=5 // pred_region
      // Predicated region
      $region25: #{bbox_head_forward.1} parent=23 // pred_check
        %p144 = pneg %p43
      $region26: #{bbox_head_forward.1} parent=23 // pred_check_branch
        %146 = sbr.rel (%p144) target = $region28
      $region27: #{bbox_head_forward.1} parent=23 // pred_region
        %s147 = smul.u32 2, %s17
        %p148 = scmp.lt.s32.totalorder %s16, 1
        %s149 = scalar_select %p148, %s16, 1
        %p150 = scmp.lt.s32.totalorder %s147, 1
        %s151 = scalar_select %p150, %s147, 1
        %s152 = smul.addr %s149, 128
        %s153 = sadd.s32 %s151, %s152
        %s154 = smul.addr %s153, 8
        %s155 = scalar_lea.vmem %s0, %s154
        %s156 = smul.u32 2, %s17
      $region28: #{bbox_head_forward.1} parent=23 // pred_fallthru
        _
    $region24: #{bbox_head_forward.1} parent=5 // pred_fallthru
      _
    %p157 = scmp.le.s32.totalorder 1, %s9
    %p158 = scmp.lt.s32.totalorder %s9, 3
    %p159 = pnand %p157, %p158
    %p160 = pneg %p159
    // Predicated region
    $region29: #{bbox_head_forward.1} parent=5 // pred_check
      _
    $region30: #{bbox_head_forward.1} parent=5 // pred_check_branch
      %162 = sbr.rel (%p159) target = $region32
    $region31: #{bbox_head_forward.1} parent=5 // pred_region
      %s163 = ssub.s32 %s9, 1
      %s164 = smul.u32 2, %s19
      %p165 = scmp.lt.s32.totalorder %s18, 1
      %s166 = scalar_select %p165, %s18, 1
      %p167 = scmp.lt.s32.totalorder %s164, 1
      %s168 = scalar_select %p167, %s164, 1
      %s169 = smul.addr %s166, 128
      %s170 = sadd.s32 %s168, %s169
      %s171 = smul.addr %s170, 8
      %s172 = scalar_lea.vmem %s0, %s171
      %p173 = pneg %p49
      %p174 = pneg %p46
      %p175 = pneg %p70
      %p176 = pneg %p67
      %p177 = pneg %p91
      %p178 = pneg %p88
      %p179 = pneg %p119
      %p180 = pneg %p116
      %s181 = smul.u32 32, %s19
      %p182 = scmp.lt.s32.totalorder %s18, 1
      %s183 = scalar_select %p182, %s18, 1
      %p184 = scmp.lt.s32.totalorder %s181, 31
      %s185 = scalar_select %p184, %s181, 31
      %s186 = smul.addr %s183, 32
      %s187 = sadd.s32 %s185, %s186
      %s188 = smul.addr %s187, 8
      %s189 = scalar_lea.vmem %s3, %s188
      %s190 = smul.u32 2, %s19
      %p191 = scmp.lt.s32.totalorder %s18, 1
      %s192 = scalar_select %p191, %s18, 1
      %p193 = scmp.lt.s32.totalorder %s190, 1
      %s194 = scalar_select %p193, %s190, 1
      %s195 = smul.addr %s192, 128
      %s196 = sadd.s32 %s194, %s195
      %s197 = smul.addr %s196, 8
      %s198 = scalar_lea.vmem %s0, %s197
      %s199 = smul.u32 2, %s19
      %s200 = smul.u32 32, %s19
      %p201 = scmp.lt.s32.totalorder %s18, 1
      %s202 = scalar_select %p201, %s18, 1
      %p203 = scmp.lt.s32.totalorder %s200, 31
      %s204 = scalar_select %p203, %s200, 31
      %s205 = smul.addr %s202, 32
      %s206 = sadd.s32 %s204, %s205
      %s207 = smul.addr %s206, 8
      %s208 = scalar_lea.vmem %s3, %s207
      %s209 = smul.u32 32, %s19
      %v210 = vld [vmem:[%s198] sm:$0xff]
      %v211 = vld [vmem:[%s198 + $0x8] sm:$0xff]
      %v212 = vld [vmem:[%s198 + $0x10] sm:$0xff]
      %v213 = vld [vmem:[%s198 + $0x18] sm:$0xff]
      %v214 = vld [vmem:[%s198 + $0x20] sm:$0xff]
      %v215 = vld [vmem:[%s198 + $0x28] sm:$0xff]
      %v216 = vld [vmem:[%s198 + $0x30] sm:$0xff]
      %v217 = vld [vmem:[%s198 + $0x38] sm:$0xff]
      %v218 = vld [vmem:[%s198 + $0x40] sm:$0xff]
      %v219 = vld [vmem:[%s198 + $0x48] sm:$0xff]
      %v220 = vld [vmem:[%s198 + $0x50] sm:$0xff]
      %v221 = vld [vmem:[%s198 + $0x58] sm:$0xff]
      %v222 = vld [vmem:[%s198 + $0x60] sm:$0xff]
      %v223 = vld [vmem:[%s198 + $0x68] sm:$0xff]
      %v224 = vld [vmem:[%s198 + $0x70] sm:$0xff]
      %v225 = vld [vmem:[%s198 + $0x78] sm:$0xff]
      %v226 = vld [vmem:[%s198 + $0x80] sm:$0xff]
      %v227 = vld [vmem:[%s198 + $0x88] sm:$0xff]
      %v228 = vld [vmem:[%s198 + $0x90] sm:$0xff]
      %v229 = vld [vmem:[%s198 + $0x98] sm:$0xff]
      %v230 = vld [vmem:[%s198 + $0xa0] sm:$0xff]
      %v231 = vld [vmem:[%s198 + $0xa8] sm:$0xff]
      %v232 = vld [vmem:[%s198 + $0xb0] sm:$0xff]
      %v233 = vld [vmem:[%s198 + $0xb8] sm:$0xff]
      %v234 = vld [vmem:[%s198 + $0xc0] sm:$0xff]
      %v235 = vld [vmem:[%s198 + $0xc8] sm:$0xff]
      %v236 = vld [vmem:[%s198 + $0xd0] sm:$0xff]
      %v237 = vld [vmem:[%s198 + $0xd8] sm:$0xff]
      %v238 = vld [vmem:[%s198 + $0xe0] sm:$0xff]
      %v239 = vld [vmem:[%s198 + $0xe8] sm:$0xff]
      %v240 = vld [vmem:[%s198 + $0xf0] sm:$0xff]
      %v241 = vld [vmem:[%s198 + $0xf8] sm:$0xff]
      %v242 = vld [vmem:[%s198 + $0x100] sm:$0xff]
      %v243 = vld [vmem:[%s198 + $0x108] sm:$0xff]
      %v244 = vld [vmem:[%s198 + $0x110] sm:$0xff]
      %v245 = vld [vmem:[%s198 + $0x118] sm:$0xff]
      %v246 = vld [vmem:[%s198 + $0x120] sm:$0xff]
      %v247 = vld [vmem:[%s198 + $0x128] sm:$0xff]
      %v248 = vld [vmem:[%s198 + $0x130] sm:$0xff]
      %v249 = vld [vmem:[%s198 + $0x138] sm:$0xff]
      %v250 = vld [vmem:[%s198 + $0x140] sm:$0xff]
      %v251 = vld [vmem:[%s198 + $0x148] sm:$0xff]
      %v252 = vld [vmem:[%s198 + $0x150] sm:$0xff]
      %v253 = vld [vmem:[%s198 + $0x158] sm:$0xff]
      %v254 = vld [vmem:[%s198 + $0x160] sm:$0xff]
      %v255 = vld [vmem:[%s198 + $0x168] sm:$0xff]
      %v256 = vld [vmem:[%s198 + $0x170] sm:$0xff]
      %v257 = vld [vmem:[%s198 + $0x178] sm:$0xff]
      %v258 = vld [vmem:[%s198 + $0x180] sm:$0xff]
      %v259 = vld [vmem:[%s198 + $0x188] sm:$0xff]
      %v260 = vld [vmem:[%s198 + $0x190] sm:$0xff]
      %v261 = vld [vmem:[%s198 + $0x198] sm:$0xff]
      %v262 = vld [vmem:[%s198 + $0x1a0] sm:$0xff]
      %v263 = vld [vmem:[%s198 + $0x1a8] sm:$0xff]
      %v264 = vld [vmem:[%s198 + $0x1b0] sm:$0xff]
      %v265 = vld [vmem:[%s198 + $0x1b8] sm:$0xff]
      %v266 = vld [vmem:[%s198 + $0x1c0] sm:$0xff]
      %v267 = vld [vmem:[%s198 + $0x1c8] sm:$0xff]
      %v268 = vld [vmem:[%s198 + $0x1d0] sm:$0xff]
      %v269 = vld [vmem:[%s198 + $0x1d8] sm:$0xff]
      %v270 = vld [vmem:[%s198 + $0x1e0] sm:$0xff]
      %v271 = vld [vmem:[%s198 + $0x1e8] sm:$0xff]
      %v272 = vld [vmem:[%s198 + $0x1f0] sm:$0xff]
      %v273 = vld [vmem:[%s198 + $0x1f8] sm:$0xff]
      %v274 = vld [vmem:[%s198 + $0x200] sm:$0xff]
      %v275 = vld [vmem:[%s198 + $0x208] sm:$0xff]
      %v276 = vld [vmem:[%s198 + $0x210] sm:$0xff]
      %v277 = vld [vmem:[%s198 + $0x218] sm:$0xff]
      %v278 = vld [vmem:[%s198 + $0x220] sm:$0xff]
      %v279 = vld [vmem:[%s198 + $0x228] sm:$0xff]
      %v280 = vld [vmem:[%s198 + $0x230] sm:$0xff]
      %v281 = vld [vmem:[%s198 + $0x238] sm:$0xff]
      %v282 = vld [vmem:[%s198 + $0x240] sm:$0xff]
      %v283 = vld [vmem:[%s198 + $0x248] sm:$0xff]
      %v284 = vld [vmem:[%s198 + $0x250] sm:$0xff]
      %v285 = vld [vmem:[%s198 + $0x258] sm:$0xff]
      %v286 = vld [vmem:[%s198 + $0x260] sm:$0xff]
      %v287 = vld [vmem:[%s198 + $0x268] sm:$0xff]
      %v288 = vld [vmem:[%s198 + $0x270] sm:$0xff]
      %v289 = vld [vmem:[%s198 + $0x278] sm:$0xff]
      %v290 = vld [vmem:[%s198 + $0x280] sm:$0xff]
      %v291 = vld [vmem:[%s198 + $0x288] sm:$0xff]
      %v292 = vld [vmem:[%s198 + $0x290] sm:$0xff]
      %v293 = vld [vmem:[%s198 + $0x298] sm:$0xff]
      %v294 = vld [vmem:[%s198 + $0x2a0] sm:$0xff]
      %v295 = vld [vmem:[%s198 + $0x2a8] sm:$0xff]
      %v296 = vld [vmem:[%s198 + $0x2b0] sm:$0xff]
      %v297 = vld [vmem:[%s198 + $0x2b8] sm:$0xff]
      %v298 = vld [vmem:[%s198 + $0x2c0] sm:$0xff]
      %v299 = vld [vmem:[%s198 + $0x2c8] sm:$0xff]
      %v300 = vld [vmem:[%s198 + $0x2d0] sm:$0xff]
      %v301 = vld [vmem:[%s198 + $0x2d8] sm:$0xff]
      %v302 = vld [vmem:[%s198 + $0x2e0] sm:$0xff]
      %v303 = vld [vmem:[%s198 + $0x2e8] sm:$0xff]
      %v304 = vld [vmem:[%s198 + $0x2f0] sm:$0xff]
      %v305 = vld [vmem:[%s198 + $0x2f8] sm:$0xff]
      %v306 = vld [vmem:[%s198 + $0x300] sm:$0xff]
      %v307 = vld [vmem:[%s198 + $0x308] sm:$0xff]
      %v308 = vld [vmem:[%s198 + $0x310] sm:$0xff]
      %v309 = vld [vmem:[%s198 + $0x318] sm:$0xff]
      %v310 = vld [vmem:[%s198 + $0x320] sm:$0xff]
      %v311 = vld [vmem:[%s198 + $0x328] sm:$0xff]
      %v312 = vld [vmem:[%s198 + $0x330] sm:$0xff]
      %v313 = vld [vmem:[%s198 + $0x338] sm:$0xff]
      %v314 = vld [vmem:[%s198 + $0x340] sm:$0xff]
      %v315 = vld [vmem:[%s198 + $0x348] sm:$0xff]
      %v316 = vld [vmem:[%s198 + $0x350] sm:$0xff]
      %v317 = vld [vmem:[%s198 + $0x358] sm:$0xff]
      %v318 = vld [vmem:[%s198 + $0x360] sm:$0xff]
      %v319 = vld [vmem:[%s198 + $0x368] sm:$0xff]
      %v320 = vld [vmem:[%s198 + $0x370] sm:$0xff]
      %v321 = vld [vmem:[%s198 + $0x378] sm:$0xff]
      %v322 = vld [vmem:[%s198 + $0x380] sm:$0xff]
      %v323 = vld [vmem:[%s198 + $0x388] sm:$0xff]
      %v324 = vld [vmem:[%s198 + $0x390] sm:$0xff]
      %v325 = vld [vmem:[%s198 + $0x398] sm:$0xff]
      %v326 = vld [vmem:[%s198 + $0x3a0] sm:$0xff]
      %v327 = vld [vmem:[%s198 + $0x3a8] sm:$0xff]
      %v328 = vld [vmem:[%s198 + $0x3b0] sm:$0xff]
      %v329 = vld [vmem:[%s198 + $0x3b8] sm:$0xff]
      %v330 = vld [vmem:[%s198 + $0x3c0] sm:$0xff]
      %v331 = vld [vmem:[%s198 + $0x3c8] sm:$0xff]
      %v332 = vld [vmem:[%s198 + $0x3d0] sm:$0xff]
      %v333 = vld [vmem:[%s198 + $0x3d8] sm:$0xff]
      %v334 = vld [vmem:[%s198 + $0x3e0] sm:$0xff]
      %v335 = vld [vmem:[%s198 + $0x3e8] sm:$0xff]
      %v336 = vld [vmem:[%s198 + $0x3f0] sm:$0xff]
      %v337 = vld [vmem:[%s198 + $0x3f8] sm:$0xff]
      %v338 = vld [vmem:[%s1] sm:$0xff]
      %v339 = vld [vmem:[%s1 + $0x8] sm:$0xff]
      %v340 = vld [vmem:[%s1 + $0x10] sm:$0xff]
      %v341 = vld [vmem:[%s1 + $0x18] sm:$0xff]
      %v342 = vld [vmem:[%s1 + $0x20] sm:$0xff]
      %v343 = vld [vmem:[%s1 + $0x28] sm:$0xff]
      %v344 = vld [vmem:[%s1 + $0x30] sm:$0xff]
      %v345 = vld [vmem:[%s1 + $0x38] sm:$0xff]
      %v346 = vld [vmem:[%s1 + $0x40] sm:$0xff]
      %v347 = vld [vmem:[%s1 + $0x48] sm:$0xff]
      %v348 = vld [vmem:[%s1 + $0x50] sm:$0xff]
      %v349 = vld [vmem:[%s1 + $0x58] sm:$0xff]
      %v350 = vld [vmem:[%s1 + $0x60] sm:$0xff]
      %v351 = vld [vmem:[%s1 + $0x68] sm:$0xff]
      %v352 = vld [vmem:[%s1 + $0x70] sm:$0xff]
      %v353 = vld [vmem:[%s1 + $0x78] sm:$0xff]
      %v354 = vld [vmem:[%s1 + $0x80] sm:$0xff]
      %v355 = vld [vmem:[%s1 + $0x88] sm:$0xff]
      %v356 = vld [vmem:[%s1 + $0x90] sm:$0xff]
      %v357 = vld [vmem:[%s1 + $0x98] sm:$0xff]
      %v358 = vld [vmem:[%s1 + $0xa0] sm:$0xff]
      %v359 = vld [vmem:[%s1 + $0xa8] sm:$0xff]
      %v360 = vld [vmem:[%s1 + $0xb0] sm:$0xff]
      %v361 = vld [vmem:[%s1 + $0xb8] sm:$0xff]
      %v362 = vld [vmem:[%s1 + $0xc0] sm:$0xff]
      %v363 = vld [vmem:[%s1 + $0xc8] sm:$0xff]
      %v364 = vld [vmem:[%s1 + $0xd0] sm:$0xff]
      %v365 = vld [vmem:[%s1 + $0xd8] sm:$0xff]
      %v366 = vld [vmem:[%s1 + $0xe0] sm:$0xff]
      %v367 = vld [vmem:[%s1 + $0xe8] sm:$0xff]
      %v368 = vld [vmem:[%s1 + $0xf0] sm:$0xff]
      %v369 = vld [vmem:[%s1 + $0xf8] sm:$0xff]
      %v370 = vld [vmem:[%s1 + $0x100] sm:$0xff]
      %v371 = vld [vmem:[%s1 + $0x108] sm:$0xff]
      %v372 = vld [vmem:[%s1 + $0x110] sm:$0xff]
      %v373 = vld [vmem:[%s1 + $0x118] sm:$0xff]
      %v374 = vld [vmem:[%s1 + $0x120] sm:$0xff]
      %v375 = vld [vmem:[%s1 + $0x128] sm:$0xff]
      %v376 = vld [vmem:[%s1 + $0x130] sm:$0xff]
      %v377 = vld [vmem:[%s1 + $0x138] sm:$0xff]
      %v378 = vld [vmem:[%s1 + $0x140] sm:$0xff]
      %v379 = vld [vmem:[%s1 + $0x148] sm:$0xff]
      %v380 = vld [vmem:[%s1 + $0x150] sm:$0xff]
      %v381 = vld [vmem:[%s1 + $0x158] sm:$0xff]
      %v382 = vld [vmem:[%s1 + $0x160] sm:$0xff]
      %v383 = vld [vmem:[%s1 + $0x168] sm:$0xff]
      %v384 = vld [vmem:[%s1 + $0x170] sm:$0xff]
      %v385 = vld [vmem:[%s1 + $0x178] sm:$0xff]
      %v386 = vld [vmem:[%s1 + $0x180] sm:$0xff]
      %v387 = vld [vmem:[%s1 + $0x188] sm:$0xff]
      %v388 = vld [vmem:[%s1 + $0x190] sm:$0xff]
      %v389 = vld [vmem:[%s1 + $0x198] sm:$0xff]
      %v390 = vld [vmem:[%s1 + $0x1a0] sm:$0xff]
      %v391 = vld [vmem:[%s1 + $0x1a8] sm:$0xff]
      %v392 = vld [vmem:[%s1 + $0x1b0] sm:$0xff]
      %v393 = vld [vmem:[%s1 + $0x1b8] sm:$0xff]
      %v394 = vld [vmem:[%s1 + $0x1c0] sm:$0xff]
      %v395 = vld [vmem:[%s1 + $0x1c8] sm:$0xff]
      %v396 = vld [vmem:[%s1 + $0x1d0] sm:$0xff]
      %v397 = vld [vmem:[%s1 + $0x1d8] sm:$0xff]
      %v398 = vld [vmem:[%s1 + $0x1e0] sm:$0xff]
      %v399 = vld [vmem:[%s1 + $0x1e8] sm:$0xff]
      %v400 = vld [vmem:[%s1 + $0x1f0] sm:$0xff]
      %v401 = vld [vmem:[%s1 + $0x1f8] sm:$0xff]
      %v402 = vld [vmem:[%s2] sm:$0x1]
      %v404 = vperm.slane %v402, 0
      %406 = vxpose.xlu0.b32.start [1/16] %v210, 128
      %407 = vxpose.xlu0.b32.cont [2/16] %v212, 128
      %408 = vxpose.xlu0.b32.cont [3/16] %v214, 128
      %409 = vxpose.xlu0.b32.cont [4/16] %v216, 128
      %410 = vxpose.xlu0.b32.cont [5/16] %v218, 128
      %411 = vxpose.xlu0.b32.cont [6/16] %v220, 128
      %412 = vxpose.xlu0.b32.cont [7/16] %v222, 128
      %413 = vxpose.xlu0.b32.cont [8/16] %v224, 128
      %414 = vxpose.xlu0.b32.cont [9/16] %v226, 128
      %415 = vxpose.xlu0.b32.cont [10/16] %v228, 128
      %416 = vxpose.xlu0.b32.cont [11/16] %v230, 128
      %417 = vxpose.xlu0.b32.cont [12/16] %v232, 128
      %418 = vxpose.xlu0.b32.cont [13/16] %v234, 128
      %419 = vxpose.xlu0.b32.cont [14/16] %v236, 128
      %420 = vxpose.xlu0.b32.cont [15/16] %v238, 128
      %421 = vxpose.xlu0.b32.end [16/16] %v240, 128
      %v422 = vpop.trf.xlu0
      %v423 = vpop.trf.xlu0
      %v424 = vpop.trf.xlu0
      %v425 = vpop.trf.xlu0
      %v426 = vpop.trf.xlu0
      %v427 = vpop.trf.xlu0
      %v428 = vpop.trf.xlu0
      %v429 = vpop.trf.xlu0
      %v430 = vpop.trf.xlu0
      %v431 = vpop.trf.xlu0
      %v432 = vpop.trf.xlu0
      %v433 = vpop.trf.xlu0
      %v434 = vpop.trf.xlu0
      %v435 = vpop.trf.xlu0
      %v436 = vpop.trf.xlu0
      %v437 = vpop.trf.xlu0
      %438 = vxpose.xlu0.b32.start [1/16] %v211, 128
      %439 = vxpose.xlu0.b32.cont [2/16] %v213, 128
      %440 = vxpose.xlu0.b32.cont [3/16] %v215, 128
      %441 = vxpose.xlu0.b32.cont [4/16] %v217, 128
      %442 = vxpose.xlu0.b32.cont [5/16] %v219, 128
      %443 = vxpose.xlu0.b32.cont [6/16] %v221, 128
      %444 = vxpose.xlu0.b32.cont [7/16] %v223, 128
      %445 = vxpose.xlu0.b32.cont [8/16] %v225, 128
      %446 = vxpose.xlu0.b32.cont [9/16] %v227, 128
      %447 = vxpose.xlu0.b32.cont [10/16] %v229, 128
      %448 = vxpose.xlu0.b32.cont [11/16] %v231, 128
      %449 = vxpose.xlu0.b32.cont [12/16] %v233, 128
      %450 = vxpose.xlu0.b32.cont [13/16] %v235, 128
      %451 = vxpose.xlu0.b32.cont [14/16] %v237, 128
      %452 = vxpose.xlu0.b32.cont [15/16] %v239, 128
      %453 = vxpose.xlu0.b32.end [16/16] %v241, 128
      %v454 = vpop.trf.xlu0
      %v455 = vpop.trf.xlu0
      %v456 = vpop.trf.xlu0
      %v457 = vpop.trf.xlu0
      %v458 = vpop.trf.xlu0
      %v459 = vpop.trf.xlu0
      %v460 = vpop.trf.xlu0
      %v461 = vpop.trf.xlu0
      %v462 = vpop.trf.xlu0
      %v463 = vpop.trf.xlu0
      %v464 = vpop.trf.xlu0
      %v465 = vpop.trf.xlu0
      %v466 = vpop.trf.xlu0
      %v467 = vpop.trf.xlu0
      %v468 = vpop.trf.xlu0
      %v469 = vpop.trf.xlu0
      %470 = vxpose.xlu0.b32.start [1/16] %v242, 128
      %471 = vxpose.xlu0.b32.cont [2/16] %v244, 128
      %472 = vxpose.xlu0.b32.cont [3/16] %v246, 128
      %473 = vxpose.xlu0.b32.cont [4/16] %v248, 128
      %474 = vxpose.xlu0.b32.cont [5/16] %v250, 128
      %475 = vxpose.xlu0.b32.cont [6/16] %v252, 128
      %476 = vxpose.xlu0.b32.cont [7/16] %v254, 128
      %477 = vxpose.xlu0.b32.cont [8/16] %v256, 128
      %478 = vxpose.xlu0.b32.cont [9/16] %v258, 128
      %479 = vxpose.xlu0.b32.cont [10/16] %v260, 128
      %480 = vxpose.xlu0.b32.cont [11/16] %v262, 128
      %481 = vxpose.xlu0.b32.cont [12/16] %v264, 128
      %482 = vxpose.xlu0.b32.cont [13/16] %v266, 128
      %483 = vxpose.xlu0.b32.cont [14/16] %v268, 128
      %484 = vxpose.xlu0.b32.cont [15/16] %v270, 128
      %485 = vxpose.xlu0.b32.end [16/16] %v272, 128
      %v486 = vpop.trf.xlu0
      %v487 = vpop.trf.xlu0
      %v488 = vpop.trf.xlu0
      %v489 = vpop.trf.xlu0
      %v490 = vpop.trf.xlu0
      %v491 = vpop.trf.xlu0
      %v492 = vpop.trf.xlu0
      %v493 = vpop.trf.xlu0
      %v494 = vpop.trf.xlu0
      %v495 = vpop.trf.xlu0
      %v496 = vpop.trf.xlu0
      %v497 = vpop.trf.xlu0
      %v498 = vpop.trf.xlu0
      %v499 = vpop.trf.xlu0
      %v500 = vpop.trf.xlu0
      %v501 = vpop.trf.xlu0
      %502 = vxpose.xlu0.b32.start [1/16] %v243, 128
      %503 = vxpose.xlu0.b32.cont [2/16] %v245, 128
      %504 = vxpose.xlu0.b32.cont [3/16] %v247, 128
      %505 = vxpose.xlu0.b32.cont [4/16] %v249, 128
      %506 = vxpose.xlu0.b32.cont [5/16] %v251, 128
      %507 = vxpose.xlu0.b32.cont [6/16] %v253, 128
      %508 = vxpose.xlu0.b32.cont [7/16] %v255, 128
      %509 = vxpose.xlu0.b32.cont [8/16] %v257, 128
      %510 = vxpose.xlu0.b32.cont [9/16] %v259, 128
      %511 = vxpose.xlu0.b32.cont [10/16] %v261, 128
      %512 = vxpose.xlu0.b32.cont [11/16] %v263, 128
      %513 = vxpose.xlu0.b32.cont [12/16] %v265, 128
      %514 = vxpose.xlu0.b32.cont [13/16] %v267, 128
      %515 = vxpose.xlu0.b32.cont [14/16] %v269, 128
      %516 = vxpose.xlu0.b32.cont [15/16] %v271, 128
      %517 = vxpose.xlu0.b32.end [16/16] %v273, 128
      %v518 = vpop.trf.xlu0
      %v519 = vpop.trf.xlu0
      %v520 = vpop.trf.xlu0
      %v521 = vpop.trf.xlu0
      %v522 = vpop.trf.xlu0
      %v523 = vpop.trf.xlu0
      %v524 = vpop.trf.xlu0
      %v525 = vpop.trf.xlu0
      %v526 = vpop.trf.xlu0
      %v527 = vpop.trf.xlu0
      %v528 = vpop.trf.xlu0
      %v529 = vpop.trf.xlu0
      %v530 = vpop.trf.xlu0
      %v531 = vpop.trf.xlu0
      %v532 = vpop.trf.xlu0
      %v533 = vpop.trf.xlu0
      %534 = vxpose.xlu0.b32.start [1/16] %v274, 128
      %535 = vxpose.xlu0.b32.cont [2/16] %v276, 128
      %536 = vxpose.xlu0.b32.cont [3/16] %v278, 128
      %537 = vxpose.xlu0.b32.cont [4/16] %v280, 128
      %538 = vxpose.xlu0.b32.cont [5/16] %v282, 128
      %539 = vxpose.xlu0.b32.cont [6/16] %v284, 128
      %540 = vxpose.xlu0.b32.cont [7/16] %v286, 128
      %541 = vxpose.xlu0.b32.cont [8/16] %v288, 128
      %542 = vxpose.xlu0.b32.cont [9/16] %v290, 128
      %543 = vxpose.xlu0.b32.cont [10/16] %v292, 128
      %544 = vxpose.xlu0.b32.cont [11/16] %v294, 128
      %545 = vxpose.xlu0.b32.cont [12/16] %v296, 128
      %546 = vxpose.xlu0.b32.cont [13/16] %v298, 128
      %547 = vxpose.xlu0.b32.cont [14/16] %v300, 128
      %548 = vxpose.xlu0.b32.cont [15/16] %v302, 128
      %549 = vxpose.xlu0.b32.end [16/16] %v304, 128
      %v550 = vpop.trf.xlu0
      %v551 = vpop.trf.xlu0
      %v552 = vpop.trf.xlu0
      %v553 = vpop.trf.xlu0
      %v554 = vpop.trf.xlu0
      %v555 = vpop.trf.xlu0
      %v556 = vpop.trf.xlu0
      %v557 = vpop.trf.xlu0
      %v558 = vpop.trf.xlu0
      %v559 = vpop.trf.xlu0
      %v560 = vpop.trf.xlu0
      %v561 = vpop.trf.xlu0
      %v562 = vpop.trf.xlu0
      %v563 = vpop.trf.xlu0
      %v564 = vpop.trf.xlu0
      %v565 = vpop.trf.xlu0
      %566 = vxpose.xlu0.b32.start [1/16] %v275, 128
      %567 = vxpose.xlu0.b32.cont [2/16] %v277, 128
      %568 = vxpose.xlu0.b32.cont [3/16] %v279, 128
      %569 = vxpose.xlu0.b32.cont [4/16] %v281, 128
      %570 = vxpose.xlu0.b32.cont [5/16] %v283, 128
      %571 = vxpose.xlu0.b32.cont [6/16] %v285, 128
      %572 = vxpose.xlu0.b32.cont [7/16] %v287, 128
      %573 = vxpose.xlu0.b32.cont [8/16] %v289, 128
      %574 = vxpose.xlu0.b32.cont [9/16] %v291, 128
      %575 = vxpose.xlu0.b32.cont [10/16] %v293, 128
      %576 = vxpose.xlu0.b32.cont [11/16] %v295, 128
      %577 = vxpose.xlu0.b32.cont [12/16] %v297, 128
      %578 = vxpose.xlu0.b32.cont [13/16] %v299, 128
      %579 = vxpose.xlu0.b32.cont [14/16] %v301, 128
      %580 = vxpose.xlu0.b32.cont [15/16] %v303, 128
      %581 = vxpose.xlu0.b32.end [16/16] %v305, 128
      %v582 = vpop.trf.xlu0
      %v583 = vpop.trf.xlu0
      %v584 = vpop.trf.xlu0
      %v585 = vpop.trf.xlu0
      %v586 = vpop.trf.xlu0
      %v587 = vpop.trf.xlu0
      %v588 = vpop.trf.xlu0
      %v589 = vpop.trf.xlu0
      %v590 = vpop.trf.xlu0
      %v591 = vpop.trf.xlu0
      %v592 = vpop.trf.xlu0
      %v593 = vpop.trf.xlu0
      %v594 = vpop.trf.xlu0
      %v595 = vpop.trf.xlu0
      %v596 = vpop.trf.xlu0
      %v597 = vpop.trf.xlu0
      %598 = vxpose.xlu0.b32.start [1/16] %v306, 128
      %599 = vxpose.xlu0.b32.cont [2/16] %v308, 128
      %600 = vxpose.xlu0.b32.cont [3/16] %v310, 128
      %601 = vxpose.xlu0.b32.cont [4/16] %v312, 128
      %602 = vxpose.xlu0.b32.cont [5/16] %v314, 128
      %603 = vxpose.xlu0.b32.cont [6/16] %v316, 128
      %604 = vxpose.xlu0.b32.cont [7/16] %v318, 128
      %605 = vxpose.xlu0.b32.cont [8/16] %v320, 128
      %606 = vxpose.xlu0.b32.cont [9/16] %v322, 128
      %607 = vxpose.xlu0.b32.cont [10/16] %v324, 128
      %608 = vxpose.xlu0.b32.cont [11/16] %v326, 128
      %609 = vxpose.xlu0.b32.cont [12/16] %v328, 128
      %610 = vxpose.xlu0.b32.cont [13/16] %v330, 128
      %611 = vxpose.xlu0.b32.cont [14/16] %v332, 128
      %612 = vxpose.xlu0.b32.cont [15/16] %v334, 128
      %613 = vxpose.xlu0.b32.end [16/16] %v336, 128
      %v614 = vpop.trf.xlu0
      %v615 = vpop.trf.xlu0
      %v616 = vpop.trf.xlu0
      %v617 = vpop.trf.xlu0
      %v618 = vpop.trf.xlu0
      %v619 = vpop.trf.xlu0
      %v620 = vpop.trf.xlu0
      %v621 = vpop.trf.xlu0
      %v622 = vpop.trf.xlu0
      %v623 = vpop.trf.xlu0
      %v624 = vpop.trf.xlu0
      %v625 = vpop.trf.xlu0
      %v626 = vpop.trf.xlu0
      %v627 = vpop.trf.xlu0
      %v628 = vpop.trf.xlu0
      %v629 = vpop.trf.xlu0
      %630 = vxpose.xlu0.b32.start [1/16] %v307, 128
      %631 = vxpose.xlu0.b32.cont [2/16] %v309, 128
      %632 = vxpose.xlu0.b32.cont [3/16] %v311, 128
      %633 = vxpose.xlu0.b32.cont [4/16] %v313, 128
      %634 = vxpose.xlu0.b32.cont [5/16] %v315, 128
      %635 = vxpose.xlu0.b32.cont [6/16] %v317, 128
      %636 = vxpose.xlu0.b32.cont [7/16] %v319, 128
      %637 = vxpose.xlu0.b32.cont [8/16] %v321, 128
      %638 = vxpose.xlu0.b32.cont [9/16] %v323, 128
      %639 = vxpose.xlu0.b32.cont [10/16] %v325, 128
      %640 = vxpose.xlu0.b32.cont [11/16] %v327, 128
      %641 = vxpose.xlu0.b32.cont [12/16] %v329, 128
      %642 = vxpose.xlu0.b32.cont [13/16] %v331, 128
      %643 = vxpose.xlu0.b32.cont [14/16] %v333, 128
      %644 = vxpose.xlu0.b32.cont [15/16] %v335, 128
      %645 = vxpose.xlu0.b32.end [16/16] %v337, 128
      %v646 = vpop.trf.xlu0
      %v647 = vpop.trf.xlu0
      %v648 = vpop.trf.xlu0
      %v649 = vpop.trf.xlu0
      %v650 = vpop.trf.xlu0
      %v651 = vpop.trf.xlu0
      %v652 = vpop.trf.xlu0
      %v653 = vpop.trf.xlu0
      %v654 = vpop.trf.xlu0
      %v655 = vpop.trf.xlu0
      %v656 = vpop.trf.xlu0
      %v657 = vpop.trf.xlu0
      %v658 = vpop.trf.xlu0
      %v659 = vpop.trf.xlu0
      %v660 = vpop.trf.xlu0
      %v661 = vpop.trf.xlu0
      %662 = vmatpush.msra.mxu0 %v353
      %663 = vmatpush.msra.mxu0 %v352
      %664 = vmatpush.msra.mxu0 %v351
      %665 = vmatpush.msra.mxu0 %v350
      %666 = vmatpush.msra.mxu0 %v349
      %667 = vmatpush.msra.mxu0 %v348
      %668 = vmatpush.msra.mxu0 %v347
      %669 = vmatpush.msra.mxu0 %v346
      %670 = vmatpush.msra.mxu0 %v345
      %671 = vmatpush.msra.mxu0 %v344
      %672 = vmatpush.msra.mxu0 %v343
      %673 = vmatpush.msra.mxu0 %v342
      %674 = vmatpush.msra.mxu0 %v341
      %675 = vmatpush.msra.mxu0 %v340
      %676 = vmatpush.msra.mxu0 %v339
      %677 = vmatpush.msra.mxu0 %v338
      %678 = vmatmul.f32.gmra.mxu0 %v422
      %v679 = vpop.f32.mrf.mxu0
      %v680 = vadd.f32 %v404, %v679
      %681 = vmatmul.f32.gmra.mxu0 %v423
      %v682 = vpop.f32.mrf.mxu0
      %v683 = vadd.f32 %v404, %v682
      %684 = vmatmul.f32.gmra.mxu0 %v424
      %v685 = vpop.f32.mrf.mxu0
      %v686 = vadd.f32 %v404, %v685
      %687 = vmatmul.f32.gmra.mxu0 %v425
      %v688 = vpop.f32.mrf.mxu0
      %v689 = vadd.f32 %v404, %v688
      %690 = vmatmul.f32.gmra.mxu0 %v426
      %v691 = vpop.f32.mrf.mxu0
      %v692 = vadd.f32 %v404, %v691
      %693 = vmatmul.f32.gmra.mxu0 %v427
      %v694 = vpop.f32.mrf.mxu0
      %v695 = vadd.f32 %v404, %v694
      %696 = vmatmul.f32.gmra.mxu0 %v428
      %v697 = vpop.f32.mrf.mxu0
      %v698 = vadd.f32 %v404, %v697
      %699 = vmatmul.f32.gmra.mxu0 %v429
      %v700 = vpop.f32.mrf.mxu0
      %v701 = vadd.f32 %v404, %v700
      %702 = vmatmul.f32.gmra.mxu0 %v430
      %v703 = vpop.f32.mrf.mxu0
      %v704 = vadd.f32 %v404, %v703
      %705 = vmatmul.f32.gmra.mxu0 %v431
      %v706 = vpop.f32.mrf.mxu0
      %v707 = vadd.f32 %v404, %v706
      %708 = vmatmul.f32.gmra.mxu0 %v432
      %v709 = vpop.f32.mrf.mxu0
      %v710 = vadd.f32 %v404, %v709
      %711 = vmatmul.f32.gmra.mxu0 %v433
      %v712 = vpop.f32.mrf.mxu0
      %v713 = vadd.f32 %v404, %v712
      %714 = vmatmul.f32.gmra.mxu0 %v434
      %v715 = vpop.f32.mrf.mxu0
      %v716 = vadd.f32 %v404, %v715
      %717 = vmatmul.f32.gmra.mxu0 %v435
      %v718 = vpop.f32.mrf.mxu0
      %v719 = vadd.f32 %v404, %v718
      %720 = vmatmul.f32.gmra.mxu0 %v436
      %v721 = vpop.f32.mrf.mxu0
      %v722 = vadd.f32 %v404, %v721
      %723 = vmatmul.f32.gmra.mxu0 %v437
      %v724 = vpop.f32.mrf.mxu0
      %v725 = vadd.f32 %v404, %v724
      %726 = vmatmul.f32.gmra.mxu0 %v454
      %v727 = vpop.f32.mrf.mxu0
      %v728 = vadd.f32 %v404, %v727
      %729 = vmatmul.f32.gmra.mxu0 %v455
      %v730 = vpop.f32.mrf.mxu0
      %v731 = vadd.f32 %v404, %v730
      %732 = vmatmul.f32.gmra.mxu0 %v456
      %v733 = vpop.f32.mrf.mxu0
      %v734 = vadd.f32 %v404, %v733
      %735 = vmatmul.f32.gmra.mxu0 %v457
      %v736 = vpop.f32.mrf.mxu0
      %v737 = vadd.f32 %v404, %v736
      %738 = vmatmul.f32.gmra.mxu0 %v458
      %v739 = vpop.f32.mrf.mxu0
      %v740 = vadd.f32 %v404, %v739
      %741 = vmatmul.f32.gmra.mxu0 %v459
      %v742 = vpop.f32.mrf.mxu0
      %v743 = vadd.f32 %v404, %v742
      %744 = vmatmul.f32.gmra.mxu0 %v460
      %v745 = vpop.f32.mrf.mxu0
      %v746 = vadd.f32 %v404, %v745
      %747 = vmatmul.f32.gmra.mxu0 %v461
      %v748 = vpop.f32.mrf.mxu0
      %v749 = vadd.f32 %v404, %v748
      %750 = vmatmul.f32.gmra.mxu0 %v462
      %v751 = vpop.f32.mrf.mxu0
      %v752 = vadd.f32 %v404, %v751
      %753 = vmatmul.f32.gmra.mxu0 %v463
      %v754 = vpop.f32.mrf.mxu0
      %v755 = vadd.f32 %v404, %v754
      %756 = vmatmul.f32.gmra.mxu0 %v464
      %v757 = vpop.f32.mrf.mxu0
      %v758 = vadd.f32 %v404, %v757
      %759 = vmatmul.f32.gmra.mxu0 %v465
      %v760 = vpop.f32.mrf.mxu0
      %v761 = vadd.f32 %v404, %v760
      %762 = vmatmul.f32.gmra.mxu0 %v466
      %v763 = vpop.f32.mrf.mxu0
      %v764 = vadd.f32 %v404, %v763
      %765 = vmatmul.f32.gmra.mxu0 %v467
      %v766 = vpop.f32.mrf.mxu0
      %v767 = vadd.f32 %v404, %v766
      %768 = vmatmul.f32.gmra.mxu0 %v468
      %v769 = vpop.f32.mrf.mxu0
      %v770 = vadd.f32 %v404, %v769
      %771 = vmatmul.f32.gmra.mxu0 %v469
      %v772 = vpop.f32.mrf.mxu0
      %v773 = vadd.f32 %v404, %v772
      %774 = vdwg.mxu0
      %775 = vmatpush.msra.mxu0 %v369
      %776 = vmatpush.msra.mxu0 %v368
      %777 = vmatpush.msra.mxu0 %v367
      %778 = vmatpush.msra.mxu0 %v366
      %779 = vmatpush.msra.mxu0 %v365
      %780 = vmatpush.msra.mxu0 %v364
      %781 = vmatpush.msra.mxu0 %v363
      %782 = vmatpush.msra.mxu0 %v362
      %783 = vmatpush.msra.mxu0 %v361
      %784 = vmatpush.msra.mxu0 %v360
      %785 = vmatpush.msra.mxu0 %v359
      %786 = vmatpush.msra.mxu0 %v358
      %787 = vmatpush.msra.mxu0 %v357
      %788 = vmatpush.msra.mxu0 %v356
      %789 = vmatpush.msra.mxu0 %v355
      %790 = vmatpush.msra.mxu0 %v354
      %791 = vmatmul.f32.gmra.mxu0 %v486
      %v792 = vpop.f32.mrf.mxu0
      %v793 = vadd.f32 %v680, %v792
      %794 = vmatmul.f32.gmra.mxu0 %v487
      %v795 = vpop.f32.mrf.mxu0
      %v796 = vadd.f32 %v683, %v795
      %797 = vmatmul.f32.gmra.mxu0 %v488
      %v798 = vpop.f32.mrf.mxu0
      %v799 = vadd.f32 %v686, %v798
      %800 = vmatmul.f32.gmra.mxu0 %v489
      %v801 = vpop.f32.mrf.mxu0
      %v802 = vadd.f32 %v689, %v801
      %803 = vmatmul.f32.gmra.mxu0 %v490
      %v804 = vpop.f32.mrf.mxu0
      %v805 = vadd.f32 %v692, %v804
      %806 = vmatmul.f32.gmra.mxu0 %v491
      %v807 = vpop.f32.mrf.mxu0
      %v808 = vadd.f32 %v695, %v807
      %809 = vmatmul.f32.gmra.mxu0 %v492
      %v810 = vpop.f32.mrf.mxu0
      %v811 = vadd.f32 %v698, %v810
      %812 = vmatmul.f32.gmra.mxu0 %v493
      %v813 = vpop.f32.mrf.mxu0
      %v814 = vadd.f32 %v701, %v813
      %815 = vmatmul.f32.gmra.mxu0 %v494
      %v816 = vpop.f32.mrf.mxu0
      %v817 = vadd.f32 %v704, %v816
      %818 = vmatmul.f32.gmra.mxu0 %v495
      %v819 = vpop.f32.mrf.mxu0
      %v820 = vadd.f32 %v707, %v819
      %821 = vmatmul.f32.gmra.mxu0 %v496
      %v822 = vpop.f32.mrf.mxu0
      %v823 = vadd.f32 %v710, %v822
      %824 = vmatmul.f32.gmra.mxu0 %v497
      %v825 = vpop.f32.mrf.mxu0
      %v826 = vadd.f32 %v713, %v825
      %827 = vmatmul.f32.gmra.mxu0 %v498
      %v828 = vpop.f32.mrf.mxu0
      %v829 = vadd.f32 %v716, %v828
      %830 = vmatmul.f32.gmra.mxu0 %v499
      %v831 = vpop.f32.mrf.mxu0
      %v832 = vadd.f32 %v719, %v831
      %833 = vmatmul.f32.gmra.mxu0 %v500
      %v834 = vpop.f32.mrf.mxu0
      %v835 = vadd.f32 %v722, %v834
      %836 = vmatmul.f32.gmra.mxu0 %v501
      %v837 = vpop.f32.mrf.mxu0
      %v838 = vadd.f32 %v725, %v837
      %839 = vmatmul.f32.gmra.mxu0 %v518
      %v840 = vpop.f32.mrf.mxu0
      %v841 = vadd.f32 %v728, %v840
      %842 = vmatmul.f32.gmra.mxu0 %v519
      %v843 = vpop.f32.mrf.mxu0
      %v844 = vadd.f32 %v731, %v843
      %845 = vmatmul.f32.gmra.mxu0 %v520
      %v846 = vpop.f32.mrf.mxu0
      %v847 = vadd.f32 %v734, %v846
      %848 = vmatmul.f32.gmra.mxu0 %v521
      %v849 = vpop.f32.mrf.mxu0
      %v850 = vadd.f32 %v737, %v849
      %851 = vmatmul.f32.gmra.mxu0 %v522
      %v852 = vpop.f32.mrf.mxu0
      %v853 = vadd.f32 %v740, %v852
      %854 = vmatmul.f32.gmra.mxu0 %v523
      %v855 = vpop.f32.mrf.mxu0
      %v856 = vadd.f32 %v743, %v855
      %857 = vmatmul.f32.gmra.mxu0 %v524
      %v858 = vpop.f32.mrf.mxu0
      %v859 = vadd.f32 %v746, %v858
      %860 = vmatmul.f32.gmra.mxu0 %v525
      %v861 = vpop.f32.mrf.mxu0
      %v862 = vadd.f32 %v749, %v861
      %863 = vmatmul.f32.gmra.mxu0 %v526
      %v864 = vpop.f32.mrf.mxu0
      %v865 = vadd.f32 %v752, %v864
      %866 = vmatmul.f32.gmra.mxu0 %v527
      %v867 = vpop.f32.mrf.mxu0
      %v868 = vadd.f32 %v755, %v867
      %869 = vmatmul.f32.gmra.mxu0 %v528
      %v870 = vpop.f32.mrf.mxu0
      %v871 = vadd.f32 %v758, %v870
      %872 = vmatmul.f32.gmra.mxu0 %v529
      %v873 = vpop.f32.mrf.mxu0
      %v874 = vadd.f32 %v761, %v873
      %875 = vmatmul.f32.gmra.mxu0 %v530
      %v876 = vpop.f32.mrf.mxu0
      %v877 = vadd.f32 %v764, %v876
      %878 = vmatmul.f32.gmra.mxu0 %v531
      %v879 = vpop.f32.mrf.mxu0
      %v880 = vadd.f32 %v767, %v879
      %881 = vmatmul.f32.gmra.mxu0 %v532
      %v882 = vpop.f32.mrf.mxu0
      %v883 = vadd.f32 %v770, %v882
      %884 = vmatmul.f32.gmra.mxu0 %v533
      %v885 = vpop.f32.mrf.mxu0
      %v886 = vadd.f32 %v773, %v885
      %887 = vdwg.mxu0
      %888 = vmatpush.msra.mxu0 %v385
      %889 = vmatpush.msra.mxu0 %v384
      %890 = vmatpush.msra.mxu0 %v383
      %891 = vmatpush.msra.mxu0 %v382
      %892 = vmatpush.msra.mxu0 %v381
      %893 = vmatpush.msra.mxu0 %v380
      %894 = vmatpush.msra.mxu0 %v379
      %895 = vmatpush.msra.mxu0 %v378
      %896 = vmatpush.msra.mxu0 %v377
      %897 = vmatpush.msra.mxu0 %v376
      %898 = vmatpush.msra.mxu0 %v375
      %899 = vmatpush.msra.mxu0 %v374
      %900 = vmatpush.msra.mxu0 %v373
      %901 = vmatpush.msra.mxu0 %v372
      %902 = vmatpush.msra.mxu0 %v371
      %903 = vmatpush.msra.mxu0 %v370
      %904 = vmatmul.f32.gmra.mxu0 %v550
      %v905 = vpop.f32.mrf.mxu0
      %v906 = vadd.f32 %v793, %v905
      %907 = vmatmul.f32.gmra.mxu0 %v551
      %v908 = vpop.f32.mrf.mxu0
      %v909 = vadd.f32 %v796, %v908
      %910 = vmatmul.f32.gmra.mxu0 %v552
      %v911 = vpop.f32.mrf.mxu0
      %v912 = vadd.f32 %v799, %v911
      %913 = vmatmul.f32.gmra.mxu0 %v553
      %v914 = vpop.f32.mrf.mxu0
      %v915 = vadd.f32 %v802, %v914
      %916 = vmatmul.f32.gmra.mxu0 %v554
      %v917 = vpop.f32.mrf.mxu0
      %v918 = vadd.f32 %v805, %v917
      %919 = vmatmul.f32.gmra.mxu0 %v555
      %v920 = vpop.f32.mrf.mxu0
      %v921 = vadd.f32 %v808, %v920
      %922 = vmatmul.f32.gmra.mxu0 %v556
      %v923 = vpop.f32.mrf.mxu0
      %v924 = vadd.f32 %v811, %v923
      %925 = vmatmul.f32.gmra.mxu0 %v557
      %v926 = vpop.f32.mrf.mxu0
      %v927 = vadd.f32 %v814, %v926
      %928 = vmatmul.f32.gmra.mxu0 %v558
      %v929 = vpop.f32.mrf.mxu0
      %v930 = vadd.f32 %v817, %v929
      %931 = vmatmul.f32.gmra.mxu0 %v559
      %v932 = vpop.f32.mrf.mxu0
      %v933 = vadd.f32 %v820, %v932
      %934 = vmatmul.f32.gmra.mxu0 %v560
      %v935 = vpop.f32.mrf.mxu0
      %v936 = vadd.f32 %v823, %v935
      %937 = vmatmul.f32.gmra.mxu0 %v561
      %v938 = vpop.f32.mrf.mxu0
      %v939 = vadd.f32 %v826, %v938
      %940 = vmatmul.f32.gmra.mxu0 %v562
      %v941 = vpop.f32.mrf.mxu0
      %v942 = vadd.f32 %v829, %v941
      %943 = vmatmul.f32.gmra.mxu0 %v563
      %v944 = vpop.f32.mrf.mxu0
      %v945 = vadd.f32 %v832, %v944
      %946 = vmatmul.f32.gmra.mxu0 %v564
      %v947 = vpop.f32.mrf.mxu0
      %v948 = vadd.f32 %v835, %v947
      %949 = vmatmul.f32.gmra.mxu0 %v565
      %v950 = vpop.f32.mrf.mxu0
      %v951 = vadd.f32 %v838, %v950
      %952 = vmatmul.f32.gmra.mxu0 %v582
      %v953 = vpop.f32.mrf.mxu0
      %v954 = vadd.f32 %v841, %v953
      %955 = vmatmul.f32.gmra.mxu0 %v583
      %v956 = vpop.f32.mrf.mxu0
      %v957 = vadd.f32 %v844, %v956
      %958 = vmatmul.f32.gmra.mxu0 %v584
      %v959 = vpop.f32.mrf.mxu0
      %v960 = vadd.f32 %v847, %v959
      %961 = vmatmul.f32.gmra.mxu0 %v585
      %v962 = vpop.f32.mrf.mxu0
      %v963 = vadd.f32 %v850, %v962
      %964 = vmatmul.f32.gmra.mxu0 %v586
      %v965 = vpop.f32.mrf.mxu0
      %v966 = vadd.f32 %v853, %v965
      %967 = vmatmul.f32.gmra.mxu0 %v587
      %v968 = vpop.f32.mrf.mxu0
      %v969 = vadd.f32 %v856, %v968
      %970 = vmatmul.f32.gmra.mxu0 %v588
      %v971 = vpop.f32.mrf.mxu0
      %v972 = vadd.f32 %v859, %v971
      %973 = vmatmul.f32.gmra.mxu0 %v589
      %v974 = vpop.f32.mrf.mxu0
      %v975 = vadd.f32 %v862, %v974
      %976 = vmatmul.f32.gmra.mxu0 %v590
      %v977 = vpop.f32.mrf.mxu0
      %v978 = vadd.f32 %v865, %v977
      %979 = vmatmul.f32.gmra.mxu0 %v591
      %v980 = vpop.f32.mrf.mxu0
      %v981 = vadd.f32 %v868, %v980
      %982 = vmatmul.f32.gmra.mxu0 %v592
      %v983 = vpop.f32.mrf.mxu0
      %v984 = vadd.f32 %v871, %v983
      %985 = vmatmul.f32.gmra.mxu0 %v593
      %v986 = vpop.f32.mrf.mxu0
      %v987 = vadd.f32 %v874, %v986
      %988 = vmatmul.f32.gmra.mxu0 %v594
      %v989 = vpop.f32.mrf.mxu0
      %v990 = vadd.f32 %v877, %v989
      %991 = vmatmul.f32.gmra.mxu0 %v595
      %v992 = vpop.f32.mrf.mxu0
      %v993 = vadd.f32 %v880, %v992
      %994 = vmatmul.f32.gmra.mxu0 %v596
      %v995 = vpop.f32.mrf.mxu0
      %v996 = vadd.f32 %v883, %v995
      %997 = vmatmul.f32.gmra.mxu0 %v597
      %v998 = vpop.f32.mrf.mxu0
      %v999 = vadd.f32 %v886, %v998
      %1000 = vdwg.mxu0
      %1001 = vmatpush.msra.mxu0 %v401
      %1002 = vmatpush.msra.mxu0 %v400
      %1003 = vmatpush.msra.mxu0 %v399
      %1004 = vmatpush.msra.mxu0 %v398
      %1005 = vmatpush.msra.mxu0 %v397
      %1006 = vmatpush.msra.mxu0 %v396
      %1007 = vmatpush.msra.mxu0 %v395
      %1008 = vmatpush.msra.mxu0 %v394
      %1009 = vmatpush.msra.mxu0 %v393
      %1010 = vmatpush.msra.mxu0 %v392
      %1011 = vmatpush.msra.mxu0 %v391
      %1012 = vmatpush.msra.mxu0 %v390
      %1013 = vmatpush.msra.mxu0 %v389
      %1014 = vmatpush.msra.mxu0 %v388
      %1015 = vmatpush.msra.mxu0 %v387
      %1016 = vmatpush.msra.mxu0 %v386
      %1017 = vmatmul.f32.gmra.mxu0 %v614
      %v1018 = vpop.f32.mrf.mxu0
      %v1019 = vadd.f32 %v906, %v1018
      %1020 = vmatmul.f32.gmra.mxu0 %v615
      %v1021 = vpop.f32.mrf.mxu0
      %v1022 = vadd.f32 %v909, %v1021
      %1023 = vmatmul.f32.gmra.mxu0 %v616
      %v1024 = vpop.f32.mrf.mxu0
      %v1025 = vadd.f32 %v912, %v1024
      %1026 = vmatmul.f32.gmra.mxu0 %v617
      %v1027 = vpop.f32.mrf.mxu0
      %v1028 = vadd.f32 %v915, %v1027
      %1029 = vmatmul.f32.gmra.mxu0 %v618
      %v1030 = vpop.f32.mrf.mxu0
      %v1031 = vadd.f32 %v918, %v1030
      %1032 = vmatmul.f32.gmra.mxu0 %v619
      %v1033 = vpop.f32.mrf.mxu0
      %v1034 = vadd.f32 %v921, %v1033
      %1035 = vmatmul.f32.gmra.mxu0 %v620
      %v1036 = vpop.f32.mrf.mxu0
      %v1037 = vadd.f32 %v924, %v1036
      %1038 = vmatmul.f32.gmra.mxu0 %v621
      %v1039 = vpop.f32.mrf.mxu0
      %v1040 = vadd.f32 %v927, %v1039
      %1041 = vmatmul.f32.gmra.mxu0 %v622
      %v1042 = vpop.f32.mrf.mxu0
      %v1043 = vadd.f32 %v930, %v1042
      %1044 = vmatmul.f32.gmra.mxu0 %v623
      %v1045 = vpop.f32.mrf.mxu0
      %v1046 = vadd.f32 %v933, %v1045
      %1047 = vmatmul.f32.gmra.mxu0 %v624
      %v1048 = vpop.f32.mrf.mxu0
      %v1049 = vadd.f32 %v936, %v1048
      %1050 = vmatmul.f32.gmra.mxu0 %v625
      %v1051 = vpop.f32.mrf.mxu0
      %v1052 = vadd.f32 %v939, %v1051
      %1053 = vmatmul.f32.gmra.mxu0 %v626
      %v1054 = vpop.f32.mrf.mxu0
      %v1055 = vadd.f32 %v942, %v1054
      %1056 = vmatmul.f32.gmra.mxu0 %v627
      %v1057 = vpop.f32.mrf.mxu0
      %v1058 = vadd.f32 %v945, %v1057
      %1059 = vmatmul.f32.gmra.mxu0 %v628
      %v1060 = vpop.f32.mrf.mxu0
      %v1061 = vadd.f32 %v948, %v1060
      %1062 = vmatmul.f32.gmra.mxu0 %v629
      %v1063 = vpop.f32.mrf.mxu0
      %v1064 = vadd.f32 %v951, %v1063
      %1065 = vmatmul.f32.gmra.mxu0 %v646
      %v1066 = vpop.f32.mrf.mxu0
      %v1067 = vadd.f32 %v954, %v1066
      %1068 = vmatmul.f32.gmra.mxu0 %v647
      %v1069 = vpop.f32.mrf.mxu0
      %v1070 = vadd.f32 %v957, %v1069
      %1071 = vmatmul.f32.gmra.mxu0 %v648
      %v1072 = vpop.f32.mrf.mxu0
      %v1073 = vadd.f32 %v960, %v1072
      %1074 = vmatmul.f32.gmra.mxu0 %v649
      %v1075 = vpop.f32.mrf.mxu0
      %v1076 = vadd.f32 %v963, %v1075
      %1077 = vmatmul.f32.gmra.mxu0 %v650
      %v1078 = vpop.f32.mrf.mxu0
      %v1079 = vadd.f32 %v966, %v1078
      %1080 = vmatmul.f32.gmra.mxu0 %v651
      %v1081 = vpop.f32.mrf.mxu0
      %v1082 = vadd.f32 %v969, %v1081
      %1083 = vmatmul.f32.gmra.mxu0 %v652
      %v1084 = vpop.f32.mrf.mxu0
      %v1085 = vadd.f32 %v972, %v1084
      %1086 = vmatmul.f32.gmra.mxu0 %v653
      %v1087 = vpop.f32.mrf.mxu0
      %v1088 = vadd.f32 %v975, %v1087
      %1089 = vmatmul.f32.gmra.mxu0 %v654
      %v1090 = vpop.f32.mrf.mxu0
      %v1091 = vadd.f32 %v978, %v1090
      %1092 = vmatmul.f32.gmra.mxu0 %v655
      %v1093 = vpop.f32.mrf.mxu0
      %v1094 = vadd.f32 %v981, %v1093
      %1095 = vmatmul.f32.gmra.mxu0 %v656
      %v1096 = vpop.f32.mrf.mxu0
      %v1097 = vadd.f32 %v984, %v1096
      %1098 = vmatmul.f32.gmra.mxu0 %v657
      %v1099 = vpop.f32.mrf.mxu0
      %v1100 = vadd.f32 %v987, %v1099
      %1101 = vmatmul.f32.gmra.mxu0 %v658
      %v1102 = vpop.f32.mrf.mxu0
      %v1103 = vadd.f32 %v990, %v1102
      %1104 = vmatmul.f32.gmra.mxu0 %v659
      %v1105 = vpop.f32.mrf.mxu0
      %v1106 = vadd.f32 %v993, %v1105
      %1107 = vmatmul.f32.gmra.mxu0 %v660
      %v1108 = vpop.f32.mrf.mxu0
      %v1109 = vadd.f32 %v996, %v1108
      %1110 = vmatmul.f32.gmra.mxu0 %v661
      %v1111 = vpop.f32.mrf.mxu0
      %v1112 = vadd.f32 %v999, %v1111
      %1113 = vdwg.mxu0
      %vm1114 = vcmask 97280
      %1115 = vst.msk [vmem:[%s208] sm:$0xff] %vm1114, %v1019
      %1116 = vst.msk [vmem:[%s208 + $0x8] sm:$0xff] %vm1114, %v1022
      %1117 = vst.msk [vmem:[%s208 + $0x10] sm:$0xff] %vm1114, %v1025
      %1118 = vst.msk [vmem:[%s208 + $0x18] sm:$0xff] %vm1114, %v1028
      %1119 = vst.msk [vmem:[%s208 + $0x20] sm:$0xff] %vm1114, %v1031
      %1120 = vst.msk [vmem:[%s208 + $0x28] sm:$0xff] %vm1114, %v1034
      %1121 = vst.msk [vmem:[%s208 + $0x30] sm:$0xff] %vm1114, %v1037
      %1122 = vst.msk [vmem:[%s208 + $0x38] sm:$0xff] %vm1114, %v1040
      %1123 = vst.msk [vmem:[%s208 + $0x40] sm:$0xff] %vm1114, %v1043
      %1124 = vst.msk [vmem:[%s208 + $0x48] sm:$0xff] %vm1114, %v1046
      %1125 = vst.msk [vmem:[%s208 + $0x50] sm:$0xff] %vm1114, %v1049
      %1126 = vst.msk [vmem:[%s208 + $0x58] sm:$0xff] %vm1114, %v1052
      %1127 = vst.msk [vmem:[%s208 + $0x60] sm:$0xff] %vm1114, %v1055
      %1128 = vst.msk [vmem:[%s208 + $0x68] sm:$0xff] %vm1114, %v1058
      %1129 = vst.msk [vmem:[%s208 + $0x70] sm:$0xff] %vm1114, %v1061
      %1130 = vst.msk [vmem:[%s208 + $0x78] sm:$0xff] %vm1114, %v1064
      %1131 = vst.msk [vmem:[%s208 + $0x80] sm:$0xff] %vm1114, %v1067
      %1132 = vst.msk [vmem:[%s208 + $0x88] sm:$0xff] %vm1114, %v1070
      %1133 = vst.msk [vmem:[%s208 + $0x90] sm:$0xff] %vm1114, %v1073
      %1134 = vst.msk [vmem:[%s208 + $0x98] sm:$0xff] %vm1114, %v1076
      %1135 = vst.msk [vmem:[%s208 + $0xa0] sm:$0xff] %vm1114, %v1079
      %1136 = vst.msk [vmem:[%s208 + $0xa8] sm:$0xff] %vm1114, %v1082
      %1137 = vst.msk [vmem:[%s208 + $0xb0] sm:$0xff] %vm1114, %v1085
      %1138 = vst.msk [vmem:[%s208 + $0xb8] sm:$0xff] %vm1114, %v1088
      %1139 = vst.msk [vmem:[%s208 + $0xc0] sm:$0xff] %vm1114, %v1091
      %1140 = vst.msk [vmem:[%s208 + $0xc8] sm:$0xff] %vm1114, %v1094
      %1141 = vst.msk [vmem:[%s208 + $0xd0] sm:$0xff] %vm1114, %v1097
      %1142 = vst.msk [vmem:[%s208 + $0xd8] sm:$0xff] %vm1114, %v1100
      %1143 = vst.msk [vmem:[%s208 + $0xe0] sm:$0xff] %vm1114, %v1103
      %1144 = vst.msk [vmem:[%s208 + $0xe8] sm:$0xff] %vm1114, %v1106
      %1145 = vst.msk [vmem:[%s208 + $0xf0] sm:$0xff] %vm1114, %v1109
      %1146 = vst.msk [vmem:[%s208 + $0xf8] sm:$0xff] %vm1114, %v1112
      %s1147 = smul.u32 32, %s19
      %p1148 = scmp.lt.s32.totalorder %s18, 1
      %s1149 = scalar_select %p1148, %s18, 1
      %p1150 = scmp.lt.s32.totalorder %s1147, 31
      %s1151 = scalar_select %p1150, %s1147, 31
      %s1152 = smul.addr %s1149, 32
      %s1153 = sadd.s32 %s1151, %s1152
      %s1154 = smul.addr %s1153, 8
      %s1155 = scalar_lea.vmem %s3, %s1154
      // Predicated region
      $region33: #{bbox_head_forward.1} parent=31 // pred_check
        %p1156 = pneg %p116
      $region34: #{bbox_head_forward.1} parent=31 // pred_check_branch
        %1158 = sbr.rel (%p1156) target = $region36
      $region35: #{bbox_head_forward.1} parent=31 // pred_region
        %s1159 = smul.u32 32, %s19
      $region36: #{bbox_head_forward.1} parent=31 // pred_fallthru
        _
    $region32: #{bbox_head_forward.1} parent=5 // pred_fallthru
      _
    %p1160 = scmp.le.s32.totalorder 2, %s9
    // Predicated region
    $region37: #{bbox_head_forward.1} parent=5 // pred_check
      %p1161 = pneg %p1160
    $region38: #{bbox_head_forward.1} parent=5 // pred_check_branch
      %1163 = sbr.rel (%p1161) target = $region40
    $region39: #{bbox_head_forward.1} parent=5 // pred_region
      %s1164 = ssub.s32 %s9, 2
      // Predicated region
      $region41: #{bbox_head_forward.1} parent=39 // pred_check
        %p1165 = pneg %p122
      $region42: #{bbox_head_forward.1} parent=39 // pred_check_branch
        %1167 = sbr.rel (%p1165) target = $region44
      $region43: #{bbox_head_forward.1} parent=39 // pred_region
        %s1168 = smul.u32 32, %s21
        %p1169 = scmp.lt.s32.totalorder %s20, 1
        %s1170 = scalar_select %p1169, %s20, 1
        %p1171 = scmp.lt.s32.totalorder %s1168, 31
        %s1172 = scalar_select %p1171, %s1168, 31
        %s1173 = smul.addr %s1170, 32
        %s1174 = sadd.s32 %s1172, %s1173
        %s1175 = smul.addr %s1174, 8
        %s1176 = scalar_lea.vmem %s3, %s1175
      $region44: #{bbox_head_forward.1} parent=39 // pred_fallthru
        _
    $region40: #{bbox_head_forward.1} parent=5 // pred_fallthru
      _
  $region6: #{bbox_head_forward.1} parent=0 // loop_footer
    %s13 = sadd.s32 1, %s9
  $region7: #{bbox_head_forward.1} parent=0 // loop_footer_branch
    %8 = sbr.rel target = $region3
  $region8: #{bbox_head_forward.1} parent=0 // loop_exit
    _

</llo_original>
